<compile_context>
chip_gen: v5e
topology: v5e:2x2
jax: 0.10.0
libtpu: 0.0.40
codegen_flags: <defaults>
</compile_context>

<pallas_src>
import jax
import jax.numpy as jnp
from jax.experimental import pallas as pl
from jax.experimental.pallas import tpu as pltpu


# -----------------------------------------------------------------------------
# Pallas kernel.  Per grid step (one image) everything is lane-dense 2D:
#   x1, x2   : (H, W*C)          NHWC flattened (lane = w*C + c)
#   w1, w3   : (W*C, W*C)        block-diagonal 1x1-conv weights
#   m        : (3, W*C, W*C)     banded depthwise dx-mixing matrices (dy=-1,0,+1)
#   srow     : (2, H, H)         row-shift matrices for dy=-1, dy=+1
#   sb       : (6, W*C)          folded scale/shift rows: s1,b1,s2,b2,s3,b3
#   e        : (2, W*C, 2*W*C)   channel-shuffle scatter matrices (even / odd lanes)
#   o        : (H, 2*W*C)        interleaved output, lane-dense store
# -----------------------------------------------------------------------------
def _shuffle_block_kernel(x1_ref, x2_ref, w1_ref, w3_ref, m_ref, srow_ref,
                          sb_ref, e_ref, o_ref):
    f32 = jnp.float32
    x2 = x2_ref[...].astype(f32)

    # ---- stage 1: 1x1 conv (block-diag, full-lane MXU matmul) + fold + ReLU ----
    y = jnp.dot(x2, w1_ref[...], preferred_element_type=f32)
    y = jnp.maximum(y * sb_ref[0:1, :] + sb_ref[1:2, :], 0.0)

    # ---- stage 2: 3x3 depthwise conv (pad=1) --------------------------------
    # dx taps are folded into banded (W*C, W*C) matrices (one per dy);
    # dy handled by tiny (H, H) shift matmuls.  No padded scratch, no masks.
    q_m = jnp.dot(y, m_ref[0], preferred_element_type=f32)   # taps for dy = -1
    q_0 = jnp.dot(y, m_ref[1], preferred_element_type=f32)   # taps for dy =  0
    q_p = jnp.dot(y, m_ref[2], preferred_element_type=f32)   # taps for dy = +1
    dw = (jnp.dot(srow_ref[0], q_m, preferred_element_type=f32)
          + q_0
          + jnp.dot(srow_ref[1], q_p, preferred_element_type=f32))
    a = jnp.maximum(dw * sb_ref[2:3, :] + sb_ref[3:4, :], 0.0)   # dw bias/BN fold + ReLU

    # ---- stage 3: 1x1 conv + fold + ReLU -------------------------------------
    z = jnp.dot(a, w3_ref[...], preferred_element_type=f32)
    z = jnp.maximum(z * sb_ref[4:5, :] + sb_ref[5:6, :], 0.0)

    # ---- fused channel_shuffle(groups=2) -------------------------------------
    # output lane 2*l <- x1 lane l ; output lane 2*l+1 <- z lane l
    out = (jnp.dot(x1_ref[...].astype(f32), e_ref[0], preferred_element_type=f32)
           + jnp.dot(z, e_ref[1], preferred_element_type=f32))
    o_ref[...] = out.astype(o_ref.dtype)


# -----------------------------------------------------------------------------
# Wrapper: NCHW in / NCHW out, exactly like the PyTorch module.
# -----------------------------------------------------------------------------
@jax.jit
def shuffle_block_forward(x_nchw, kp):
    N, C2, H, W = x_nchw.shape
    C = C2 // 2
    WC = W * C

    # Lane-dense NHWC-flat views of the two channel halves (one fused XLA transpose
    # each; x1 goes straight into the kernel so the shuffle happens on-chip).
    x1f = jnp.transpose(x_nchw[:, :C], (0, 2, 3, 1)).reshape(N, H, WC)
    x2f = jnp.transpose(x_nchw[:, C:], (0, 2, 3, 1)).reshape(N, H, WC)

    # VMEM per grid step (f32): activations 3*(H*WC..2WC) ~ 32 KiB + ~0.6 MiB of
    # resident weights; double-buffered this is well under the 32 MiB scoped default
    # (and under v7x's 64 MiB physical VMEM).
    # TODO(synk): for large H*W*C, tile H with a 1-row halo instead of whole images.
    out_flat = pl.pallas_call(
        _shuffle_block_kernel,
        grid=(N,),
        in_specs=[
            pl.BlockSpec((None, H, WC), lambda n: (n, 0, 0)),     # x1 (passthrough half)
            pl.BlockSpec((None, H, WC), lambda n: (n, 0, 0)),     # x2 (processed half)
            pl.BlockSpec((WC, WC), lambda n: (0, 0)),             # w1 block-diag
            pl.BlockSpec((WC, WC), lambda n: (0, 0)),             # w3 block-diag
            pl.BlockSpec((3, WC, WC), lambda n: (0, 0, 0)),       # depthwise dx bands
            pl.BlockSpec((2, H, H), lambda n: (0, 0, 0)),         # dy row shifts
            pl.BlockSpec((6, WC), lambda n: (0, 0)),              # scale/shift rows
            pl.BlockSpec((2, WC, 2 * WC), lambda n: (0, 0, 0)),   # shuffle scatter
        ],
        out_specs=pl.BlockSpec((None, H, 2 * WC), lambda n: (n, 0, 0)),
        out_shape=jax.ShapeDtypeStruct((N, H, 2 * WC), x_nchw.dtype),
        compiler_params=pltpu.CompilerParams(
            dimension_semantics=("parallel",),      # megacore-shard images (v7x: 2 TCs)
            vmem_limit_bytes=32 * 1024 * 1024,
        ),
    )(x1f, x2f, kp["w1_bd"], kp["w3_bd"], kp["m_dw"], kp["s_row"], kp["sb"],
      kp["e_shuf"])

    # Single epilogue transpose back to NCHW.
    return jnp.transpose(out_flat.reshape(N, H, W, 2 * C), (0, 3, 1, 2))


# -----------------------------------------------------------------------------
# One-time host-side preparation of the lane-dense kernel operands.
#   lane index convention: l = w*C + c
# -----------------------------------------------------------------------------
def prepare_kernel_params(params, H, W):
    f32 = jnp.float32
    C = params["w1"].shape[0]
    WC = W * C

    eye_w = jnp.eye(W, dtype=f32)
    w1_bd = jnp.kron(eye_w, params["w1"].astype(f32))          # (WC, WC)
    w3_bd = jnp.kron(eye_w, params["w3"].astype(f32))

    # Banded depthwise matrices: M_dy[(w+dx)*C + c, w*C + c] = K[dy+1, dx+1, c]
    m_list = []
    for i in range(3):                                         # dy = i - 1
        m = jnp.zeros((WC, WC), f32)
        for j, dx in enumerate((-1, 0, 1)):                    # dx = j - 1
            m = m + jnp.kron(jnp.eye(W, k=-dx, dtype=f32),
                             jnp.diag(params["wdw"][i, j].astype(f32)))
        m_list.append(m)
    m_dw = jnp.stack(m_list)                                   # (3, WC, WC)

    # Row-shift matrices: (S_dy @ Q)[h] = Q[h + dy] with zero padding.
    s_row = jnp.stack([jnp.eye(H, k=-1, dtype=f32),            # dy = -1
                       jnp.eye(H, k=+1, dtype=f32)])           # dy = +1

    def tile(v):                                               # per-channel -> per-lane
        return jnp.tile(v.astype(f32), W)
    sb = jnp.stack([tile(params["s1"]), tile(params["b1"]),
                    tile(params["s2"]), tile(params["b2"]),
                    tile(params["s3"]), tile(params["b3"])])   # (6, WC)

    # channel_shuffle(groups=2) scatter: even output lane 2l <- lane l, odd 2l+1 <- lane l.
    e_even = jnp.kron(jnp.eye(WC, dtype=f32), jnp.array([[1.0, 0.0]], f32))  # (WC, 2WC)
    e_odd = jnp.kron(jnp.eye(WC, dtype=f32), jnp.array([[0.0, 1.0]], f32))
    e_shuf = jnp.stack([e_even, e_odd])                        # (2, WC, 2WC)

    return dict(w1_bd=w1_bd, w3_bd=w3_bd, m_dw=m_dw, s_row=s_row, sb=sb,
                e_shuf=e_shuf)


# -----------------------------------------------------------------------------
# Deterministic parameters (default ShuffleBlock config: bias=True, bn=False, ReLU).
# BatchNorm (when enabled) and the depthwise bias are folded into per-channel
# scale/shift pairs (inference form).
# -----------------------------------------------------------------------------
def make_params(C, key, *, bn=False, bias=True, eps=1e-5):
    ks = jax.random.split(key, 16)
    w1 = 0.1 * jax.random.normal(ks[0], (C, C), jnp.float32)      # (C_in, C_out)
    w3 = 0.1 * jax.random.normal(ks[1], (C, C), jnp.float32)
    wdw = 0.1 * jax.random.normal(ks[2], (3, 3, C), jnp.float32)  # (kh, kw, C)
    b_dw = (0.1 * jax.random.normal(ks[3], (C,), jnp.float32)
            if bias else jnp.zeros((C,), jnp.float32))

    def fold(kg, kb, km, kv, pre_bias):
        if bn:
            gamma = 0.5 + jax.random.uniform(kg, (C,), jnp.float32)
            beta = 0.1 * jax.random.normal(kb, (C,), jnp.float32)
            mean = 0.1 * jax.random.normal(km, (C,), jnp.float32)
            var = 0.5 + jax.random.uniform(kv, (C,), jnp.float32)
            scale = gamma / jnp.sqrt(var + eps)
            shift = beta - mean * scale
            return scale, scale * pre_bias + shift
        return jnp.ones((C,), jnp.float32), pre_bias

    zero = jnp.zeros((C,), jnp.float32)
    s1, b1 = fold(ks[4], ks[5], ks[6], ks[7], zero)    # conv_1x1 never has a bias
    s2, b2 = fold(ks[8], ks[9], ks[10], ks[11], b_dw)  # depthwise bias folded here
    s3, b3 = fold(ks[12], ks[13], ks[14], ks[15], zero)
    return dict(w1=w1, w3=w3, wdw=wdw, s1=s1, b1=b1, s2=s2, b2=b2, s3=s3, b3=b3)


# -----------------------------------------------------------------------------
# Pure-JAX reference (independent of the prepared kernel operands).
# -----------------------------------------------------------------------------
def _reference_forward(x_nchw, params):
    N, C2, H, W = x_nchw.shape
    C = C2 // 2
    hi = jax.lax.Precision.HIGHEST
    x = jnp.transpose(x_nchw, (0, 2, 3, 1))
    x1, x2 = x[..., :C], x[..., C:]

    y = jnp.einsum("nhwc,cd->nhwd", x2, params["w1"], precision=hi)
    y = jnp.maximum(y * params["s1"] + params["b1"], 0.0)

    yp = jnp.pad(y, ((0, 0), (1, 1), (1, 1), (0, 0)))
    acc = jnp.zeros_like(y)
    for i in range(3):
        for j in range(3):
            acc = acc + yp[:, i:i + H, j:j + W, :] * params["wdw"][i, j]
    acc = jnp.maximum(acc * params["s2"] + params["b2"], 0.0)

    z = jnp.einsum("nhwc,cd->nhwd", acc, params["w3"], precision=hi)
    z = jnp.maximum(z * params["s3"] + params["b3"], 0.0)

    # cat(x1, z) followed by channel_shuffle(groups=2) == channel interleave.
    out = jnp.stack([x1, z], axis=-1).reshape(N, H, W, 2 * C)
    return jnp.transpose(out, (0, 3, 1, 2))


if __name__ == "__main__":
    # ShuffleBlock(16, 16) default config; half = 8 channels, W*C = 128 = one full
    # vreg lane width, so the kernel's working slabs are exactly lane-dense.
    N, IN_CH, H, W = 2, 16, 16, 16

    key = jax.random.PRNGKey(0)
    kx, kp = jax.random.split(key)
    x = jax.random.normal(kx, (N, IN_CH, H, W), jnp.float32)      # NCHW like PyTorch
    params = make_params(IN_CH // 2, kp)                          # bias=True, bn=False
    kparams = prepare_kernel_params(params, H, W)                 # built once

    out = jax.block_until_ready(shuffle_block_forward(x, kparams))
    ref = _reference_forward(x, params)

    assert out.shape == (N, IN_CH, H, W), out.shape
    # Tolerance covers MXU f32 pass-splitting differences between the matmul-based
    # kernel formulation and the elementwise reference (any layout bug is O(0.1+)).
    max_err = float(jnp.max(jnp.abs(out - ref)))
    assert jnp.allclose(out, ref, atol=1e-3, rtol=1e-3), max_err

    print("KERNEL_OK")
</pallas_src>

<mosaic_0001>
module attributes {stable_mosaic.version = 11 : i64} {
  func.func @_shuffle_block_kernel(%arg0: i32, %arg1: memref<1x16x128xf32, #tpu.memory_space<vmem>>, %arg2: memref<1x16x128xf32, #tpu.memory_space<vmem>>, %arg3: memref<128x128xf32, #tpu.memory_space<vmem>>, %arg4: memref<128x128xf32, #tpu.memory_space<vmem>>, %arg5: memref<3x128x128xf32, #tpu.memory_space<vmem>>, %arg6: memref<2x16x16xf32, #tpu.memory_space<vmem>>, %arg7: memref<6x128xf32, #tpu.memory_space<vmem>>, %arg8: memref<2x128x256xf32, #tpu.memory_space<vmem>>, %arg9: memref<1x16x256xf32, #tpu.memory_space<vmem>>) attributes {dimension_semantics = [#tpu.dimension_semantics<parallel>], iteration_bounds = array<i64: 2>, scalar_prefetch = 0 : i64, scratch_operands = 0 : i64, tpu.core_type = #tpu.core_type<tc>, window_params = [{transform_indices = @transform_0, window_bounds = array<i64: 1, 16, 128>}, {transform_indices = @transform_1, window_bounds = array<i64: 1, 16, 128>}, {pipeline_mode = #tpu.pipeline_mode<synchronous>, transform_indices = @transform_2, window_bounds = array<i64: 128, 128>}, {pipeline_mode = #tpu.pipeline_mode<synchronous>, transform_indices = @transform_3, window_bounds = array<i64: 128, 128>}, {pipeline_mode = #tpu.pipeline_mode<synchronous>, transform_indices = @transform_4, window_bounds = array<i64: 3, 128, 128>}, {pipeline_mode = #tpu.pipeline_mode<synchronous>, transform_indices = @transform_5, window_bounds = array<i64: 2, 16, 16>}, {pipeline_mode = #tpu.pipeline_mode<synchronous>, transform_indices = @transform_6, window_bounds = array<i64: 6, 128>}, {pipeline_mode = #tpu.pipeline_mode<synchronous>, transform_indices = @transform_7, window_bounds = array<i64: 2, 128, 256>}, {transform_indices = @transform_8, window_bounds = array<i64: 1, 16, 256>}]} {
    %c0 = arith.constant 0 : index
    %c0_0 = arith.constant 0 : index
    %c0_1 = arith.constant 0 : index
    %0 = vector.load %arg2[%c0, %c0_0, %c0_1] : memref<1x16x128xf32, #tpu.memory_space<vmem>>, vector<1x16x128xf32>
    %1 = vector.shape_cast %0 : vector<1x16x128xf32> to vector<16x128xf32>
    %c0_2 = arith.constant 0 : index
    %c0_3 = arith.constant 0 : index
    %2 = vector.load %arg3[%c0_2, %c0_3] : memref<128x128xf32, #tpu.memory_space<vmem>>, vector<128x128xf32>
    %cst = arith.constant dense<0.000000e+00> : vector<16x128xf32>
    %3 = tpu.matmul %1, %2, %cst {dimension_numbers = #tpu.dot_dimension_numbers<[1], [0], [0], [1], [0, 0, 1, 1], [], []>} : vector<16x128xf32>, vector<128x128xf32>, vector<16x128xf32> -> vector<16x128xf32>
    %c0_4 = arith.constant 0 : index
    %c0_5 = arith.constant 0 : index
    %4 = vector.load %arg7[%c0_4, %c0_5] : memref<6x128xf32, #tpu.memory_space<vmem>>, vector<1x128xf32>
    %5 = vector.broadcast %4 : vector<1x128xf32> to vector<16x128xf32>
    %6 = arith.mulf %3, %5 : vector<16x128xf32>
    %c1 = arith.constant 1 : index
    %c0_6 = arith.constant 0 : index
    %7 = vector.load %arg7[%c1, %c0_6] : memref<6x128xf32, #tpu.memory_space<vmem>>, vector<1x128xf32>
    %8 = vector.broadcast %7 : vector<1x128xf32> to vector<16x128xf32>
    %9 = arith.addf %6, %8 : vector<16x128xf32>
    %cst_7 = arith.constant 0.000000e+00 : f32
    %10 = vector.broadcast %cst_7 : f32 to vector<16x128xf32>
    %11 = arith.maximumf %9, %10 : vector<16x128xf32>
    %c0_8 = arith.constant 0 : index
    %c0_9 = arith.constant 0 : index
    %c0_10 = arith.constant 0 : index
    %12 = vector.load %arg5[%c0_8, %c0_9, %c0_10] : memref<3x128x128xf32, #tpu.memory_space<vmem>>, vector<1x128x128xf32>
    %13 = vector.shape_cast %12 : vector<1x128x128xf32> to vector<128x128xf32>
    %cst_11 = arith.constant dense<0.000000e+00> : vector<16x128xf32>
    %14 = tpu.matmul %11, %13, %cst_11 {dimension_numbers = #tpu.dot_dimension_numbers<[1], [0], [0], [1], [0, 0, 1, 1], [], []>} : vector<16x128xf32>, vector<128x128xf32>, vector<16x128xf32> -> vector<16x128xf32>
    %c1_12 = arith.constant 1 : index
    %c0_13 = arith.constant 0 : index
    %c0_14 = arith.constant 0 : index
    %15 = vector.load %arg5[%c1_12, %c0_13, %c0_14] : memref<3x128x128xf32, #tpu.memory_space<vmem>>, vector<1x128x128xf32>
    %16 = vector.shape_cast %15 : vector<1x128x128xf32> to vector<128x128xf32>
    %cst_15 = arith.constant dense<0.000000e+00> : vector<16x128xf32>
    %17 = tpu.matmul %11, %16, %cst_15 {dimension_numbers = #tpu.dot_dimension_numbers<[1], [0], [0], [1], [0, 0, 1, 1], [], []>} : vector<16x128xf32>, vector<128x128xf32>, vector<16x128xf32> -> vector<16x128xf32>
    %c2 = arith.constant 2 : index
    %c0_16 = arith.constant 0 : index
    %c0_17 = arith.constant 0 : index
    %18 = vector.load %arg5[%c2, %c0_16, %c0_17] : memref<3x128x128xf32, #tpu.memory_space<vmem>>, vector<1x128x128xf32>
    %19 = vector.shape_cast %18 : vector<1x128x128xf32> to vector<128x128xf32>
    %cst_18 = arith.constant dense<0.000000e+00> : vector<16x128xf32>
    %20 = tpu.matmul %11, %19, %cst_18 {dimension_numbers = #tpu.dot_dimension_numbers<[1], [0], [0], [1], [0, 0, 1, 1], [], []>} : vector<16x128xf32>, vector<128x128xf32>, vector<16x128xf32> -> vector<16x128xf32>
    %c0_19 = arith.constant 0 : index
    %c0_20 = arith.constant 0 : index
    %c0_21 = arith.constant 0 : index
    %21 = vector.load %arg6[%c0_19, %c0_20, %c0_21] : memref<2x16x16xf32, #tpu.memory_space<vmem>>, vector<1x16x16xf32>
    %22 = vector.shape_cast %21 : vector<1x16x16xf32> to vector<16x16xf32>
    %cst_22 = arith.constant dense<0.000000e+00> : vector<16x128xf32>
    %23 = tpu.matmul %22, %14, %cst_22 {dimension_numbers = #tpu.dot_dimension_numbers<[1], [0], [0], [1], [0, 0, 1, 1], [], []>} : vector<16x16xf32>, vector<16x128xf32>, vector<16x128xf32> -> vector<16x128xf32>
    %24 = arith.addf %23, %17 : vector<16x128xf32>
    %c1_23 = arith.constant 1 : index
    %c0_24 = arith.constant 0 : index
    %c0_25 = arith.constant 0 : index
    %25 = vector.load %arg6[%c1_23, %c0_24, %c0_25] : memref<2x16x16xf32, #tpu.memory_space<vmem>>, vector<1x16x16xf32>
    %26 = vector.shape_cast %25 : vector<1x16x16xf32> to vector<16x16xf32>
    %cst_26 = arith.constant dense<0.000000e+00> : vector<16x128xf32>
    %27 = tpu.matmul %26, %20, %cst_26 {dimension_numbers = #tpu.dot_dimension_numbers<[1], [0], [0], [1], [0, 0, 1, 1], [], []>} : vector<16x16xf32>, vector<16x128xf32>, vector<16x128xf32> -> vector<16x128xf32>
    %28 = arith.addf %24, %27 : vector<16x128xf32>
    %c2_27 = arith.constant 2 : index
    %c0_28 = arith.constant 0 : index
    %29 = vector.load %arg7[%c2_27, %c0_28] : memref<6x128xf32, #tpu.memory_space<vmem>>, vector<1x128xf32>
    %30 = vector.broadcast %29 : vector<1x128xf32> to vector<16x128xf32>
    %31 = arith.mulf %28, %30 : vector<16x128xf32>
    %c3 = arith.constant 3 : index
    %c0_29 = arith.constant 0 : index
    %32 = vector.load %arg7[%c3, %c0_29] : memref<6x128xf32, #tpu.memory_space<vmem>>, vector<1x128xf32>
    %33 = vector.broadcast %32 : vector<1x128xf32> to vector<16x128xf32>
    %34 = arith.addf %31, %33 : vector<16x128xf32>
    %cst_30 = arith.constant 0.000000e+00 : f32
    %35 = vector.broadcast %cst_30 : f32 to vector<16x128xf32>
    %36 = arith.maximumf %34, %35 : vector<16x128xf32>
    %c0_31 = arith.constant 0 : index
    %c0_32 = arith.constant 0 : index
    %37 = vector.load %arg4[%c0_31, %c0_32] : memref<128x128xf32, #tpu.memory_space<vmem>>, vector<128x128xf32>
    %cst_33 = arith.constant dense<0.000000e+00> : vector<16x128xf32>
    %38 = tpu.matmul %36, %37, %cst_33 {dimension_numbers = #tpu.dot_dimension_numbers<[1], [0], [0], [1], [0, 0, 1, 1], [], []>} : vector<16x128xf32>, vector<128x128xf32>, vector<16x128xf32> -> vector<16x128xf32>
    %c4 = arith.constant 4 : index
    %c0_34 = arith.constant 0 : index
    %39 = vector.load %arg7[%c4, %c0_34] : memref<6x128xf32, #tpu.memory_space<vmem>>, vector<1x128xf32>
    %40 = vector.broadcast %39 : vector<1x128xf32> to vector<16x128xf32>
    %41 = arith.mulf %38, %40 : vector<16x128xf32>
    %c5 = arith.constant 5 : index
    %c0_35 = arith.constant 0 : index
    %42 = vector.load %arg7[%c5, %c0_35] : memref<6x128xf32, #tpu.memory_space<vmem>>, vector<1x128xf32>
    %43 = vector.broadcast %42 : vector<1x128xf32> to vector<16x128xf32>
    %44 = arith.addf %41, %43 : vector<16x128xf32>
    %cst_36 = arith.constant 0.000000e+00 : f32
    %45 = vector.broadcast %cst_36 : f32 to vector<16x128xf32>
    %46 = arith.maximumf %44, %45 : vector<16x128xf32>
    %c0_37 = arith.constant 0 : index
    %c0_38 = arith.constant 0 : index
    %c0_39 = arith.constant 0 : index
    %47 = vector.load %arg1[%c0_37, %c0_38, %c0_39] : memref<1x16x128xf32, #tpu.memory_space<vmem>>, vector<1x16x128xf32>
    %48 = vector.shape_cast %47 : vector<1x16x128xf32> to vector<16x128xf32>
    %c0_40 = arith.constant 0 : index
    %c0_41 = arith.constant 0 : index
    %c0_42 = arith.constant 0 : index
    %49 = vector.load %arg8[%c0_40, %c0_41, %c0_42] : memref<2x128x256xf32, #tpu.memory_space<vmem>>, vector<1x128x256xf32>
    %50 = vector.shape_cast %49 : vector<1x128x256xf32> to vector<128x256xf32>
    %cst_43 = arith.constant dense<0.000000e+00> : vector<16x256xf32>
    %51 = tpu.matmul %48, %50, %cst_43 {dimension_numbers = #tpu.dot_dimension_numbers<[1], [0], [0], [1], [0, 0, 1, 1], [], []>} : vector<16x128xf32>, vector<128x256xf32>, vector<16x256xf32> -> vector<16x256xf32>
    %c1_44 = arith.constant 1 : index
    %c0_45 = arith.constant 0 : index
    %c0_46 = arith.constant 0 : index
    %52 = vector.load %arg8[%c1_44, %c0_45, %c0_46] : memref<2x128x256xf32, #tpu.memory_space<vmem>>, vector<1x128x256xf32>
    %53 = vector.shape_cast %52 : vector<1x128x256xf32> to vector<128x256xf32>
    %cst_47 = arith.constant dense<0.000000e+00> : vector<16x256xf32>
    %54 = tpu.matmul %46, %53, %cst_47 {dimension_numbers = #tpu.dot_dimension_numbers<[1], [0], [0], [1], [0, 0, 1, 1], [], []>} : vector<16x128xf32>, vector<128x256xf32>, vector<16x256xf32> -> vector<16x256xf32>
    %55 = arith.addf %51, %54 : vector<16x256xf32>
    %c0_48 = arith.constant 0 : index
    %c0_49 = arith.constant 0 : index
    %c0_50 = arith.constant 0 : index
    %56 = vector.load %arg9[%c0_48, %c0_49, %c0_50] : memref<1x16x256xf32, #tpu.memory_space<vmem>>, vector<1x16x256xf32>
    %57 = vector.shape_cast %56 : vector<1x16x256xf32> to vector<16x256xf32>
    %58 = vector.shape_cast %55 : vector<16x256xf32> to vector<1x16x256xf32>
    tpu.vector_store %arg9[%c0_48, %c0_49, %c0_50], %58 {strides = array<i32>} : memref<1x16x256xf32, #tpu.memory_space<vmem>>, vector<1x16x256xf32>,
    return
  }
  func.func @transform_0(%arg0: i32) -> (i32, i32, i32) {
    %c0_i32 = arith.constant 0 : i32
    %c0_i32_0 = arith.constant 0 : i32
    %c0_i32_1 = arith.constant 0 : i32
    return %arg0, %c0_i32, %c0_i32_0 : i32, i32, i32
  }
  func.func @transform_1(%arg0: i32) -> (i32, i32, i32) {
    %c0_i32 = arith.constant 0 : i32
    %c0_i32_0 = arith.constant 0 : i32
    %c0_i32_1 = arith.constant 0 : i32
    return %arg0, %c0_i32, %c0_i32_0 : i32, i32, i32
  }
  func.func @transform_2(%arg0: i32) -> (i32, i32) {
    %c0_i32 = arith.constant 0 : i32
    %c0_i32_0 = arith.constant 0 : i32
    %c0_i32_1 = arith.constant 0 : i32
    return %c0_i32, %c0_i32_0 : i32, i32
  }
  func.func @transform_3(%arg0: i32) -> (i32, i32) {
    %c0_i32 = arith.constant 0 : i32
    %c0_i32_0 = arith.constant 0 : i32
    %c0_i32_1 = arith.constant 0 : i32
    return %c0_i32, %c0_i32_0 : i32, i32
  }
  func.func @transform_4(%arg0: i32) -> (i32, i32, i32) {
    %c0_i32 = arith.constant 0 : i32
    %c0_i32_0 = arith.constant 0 : i32
    %c0_i32_1 = arith.constant 0 : i32
    %c0_i32_2 = arith.constant 0 : i32
    return %c0_i32, %c0_i32_0, %c0_i32_1 : i32, i32, i32
  }
  func.func @transform_5(%arg0: i32) -> (i32, i32, i32) {
    %c0_i32 = arith.constant 0 : i32
    %c0_i32_0 = arith.constant 0 : i32
    %c0_i32_1 = arith.constant 0 : i32
    %c0_i32_2 = arith.constant 0 : i32
    return %c0_i32, %c0_i32_0, %c0_i32_1 : i32, i32, i32
  }
  func.func @transform_6(%arg0: i32) -> (i32, i32) {
    %c0_i32 = arith.constant 0 : i32
    %c0_i32_0 = arith.constant 0 : i32
    %c0_i32_1 = arith.constant 0 : i32
    return %c0_i32, %c0_i32_0 : i32, i32
  }
  func.func @transform_7(%arg0: i32) -> (i32, i32, i32) {
    %c0_i32 = arith.constant 0 : i32
    %c0_i32_0 = arith.constant 0 : i32
    %c0_i32_1 = arith.constant 0 : i32
    %c0_i32_2 = arith.constant 0 : i32
    return %c0_i32, %c0_i32_0, %c0_i32_1 : i32, i32, i32
  }
  func.func @transform_8(%arg0: i32) -> (i32, i32, i32) {
    %c0_i32 = arith.constant 0 : i32
    %c0_i32_0 = arith.constant 0 : i32
    %c0_i32_1 = arith.constant 0 : i32
    return %arg0, %c0_i32, %c0_i32_0 : i32, i32, i32
  }
}

</mosaic_0001>

<llo_original>
// kernel: shuffle_block_forward.1
$region0: #{shuffle_block_forward.1}
  #allocation0 [shape = 'u32[]', space=smem, size = 0x4, offset = 0x4, fixed_abs, tag = 'smem constant byte address 0x4 - core index']
  #allocation1 [shape = 'u32[72,128]{1,0:T(1,128)}', space=vmem, size = 0x9000, scoped, tag = 'internal scratch']
  %s0 = inlined_call_operand.vmem [shape: f32[2,16,128], index: 0, kind: input, shape index: {}]
  %s1 = inlined_call_operand.vmem [shape: f32[2,16,128], index: 1, kind: input, shape index: {}]
  %s2 = inlined_call_operand.vmem [shape: f32[128,128], index: 2, kind: input, shape index: {}]
  %s3 = inlined_call_operand.vmem [shape: f32[128,128], index: 3, kind: input, shape index: {}]
  %s4 = inlined_call_operand.vmem [shape: f32[3,128,128], index: 4, kind: input, shape index: {}]
  %s5 = inlined_call_operand.vmem [shape: f32[2,16,16], index: 5, kind: input, shape index: {}]
  %s6 = inlined_call_operand.vmem [shape: f32[6,128], index: 6, kind: input, shape index: {}]
  %s7 = inlined_call_operand.vmem [shape: f32[2,128,256], index: 7, kind: input, shape index: {}]
  %s8 = inlined_call_operand.vmem [shape: f32[2,16,256], index: 8, kind: output, shape index: {}]
  %s9 = sld [smem:[#allocation0]]
  $region65: #{shuffle_block_forward.1} parent=0
    _
  %s11 = ssub.s32 1, %s9
  %s12 = scalar_select 0, %s11, %s9
  loop: start=0, step=1, limit=4
  $region2: #{shuffle_block_forward.1} parent=0 // loop_pre_header
    _
  $region3: #{shuffle_block_forward.1} parent=0 // loop_header
    %s14 = sphi 0, %s18
    %p15 = scmp.ge.s32.totalorder %s14, 4
    %s24 = sphi 0, %s26
    %s27 = sphi 0, %s24
    %s28 = sphi 0, %s27
    %s44 = sphi 0, %s28
    %s50 = sphi 0, %s52
    %s53 = sphi 0, %s50
    %s54 = sphi 0, %s53
    %s70 = sphi 0, %s54
    %s74 = sphi 0, %s74
    %s76 = sphi 0, %s74
    %s77 = sphi 0, %s76
    %s91 = sphi 0, %s77
    %s95 = sphi 0, %s95
    %s97 = sphi 0, %s95
    %s98 = sphi 0, %s97
    %s112 = sphi 0, %s98
    %s116 = sphi 0, %s116
    %s118 = sphi 0, %s116
    %s119 = sphi 0, %s118
    %s133 = sphi 0, %s119
    %s137 = sphi 0, %s137
    %s139 = sphi 0, %s137
    %s140 = sphi 0, %s139
    %s154 = sphi 0, %s140
    %s158 = sphi 0, %s158
    %s160 = sphi 0, %s158
    %s161 = sphi 0, %s160
    %s175 = sphi 0, %s161
    %s179 = sphi 0, %s179
    %s181 = sphi 0, %s179
    %s182 = sphi 0, %s181
    %s196 = sphi 0, %s182
    %s202 = sphi 0, %s204
    %s205 = sphi 0, %s202
    %s206 = sphi 0, %s205
    %s222 = sphi 0, %s206
  $region4: #{shuffle_block_forward.1} parent=0 // loop_header_branch
    %17 = sbr.rel (%p15) target = $region8
  $region5: #{shuffle_block_forward.1} parent=0 // loop_body
    %s19 = ssub.s32 %s14, 1
    %s20 = ssub.s32 %s14, 2
    %s21 = sadd.s32 %s14, 1
    %s22 = ssub.s32 %s14, %s21
    %p23 = scmp.eq.s32.totalorder %s22, 0
    %s25 = sadd.s32 %s24, 1
    %s26 = scalar_select %p23, %s24, %s25
    %p29 = pneg %p23
    %p30 = scmp.eq.s32.totalorder %s14, 1
    %p31 = por %p29, %p30
    %p32 = scmp.ne.s32.totalorder %s24, %s27
    %p33 = scmp.eq.s32.totalorder %s14, 0
    %p34 = por %p32, %p33
    %p35 = scmp.ne.s32.totalorder %s24, %s27
    %p36 = scmp.eq.s32.totalorder %s19, 1
    %p37 = por %p35, %p36
    %p38 = scmp.ne.s32.totalorder %s27, %s28
    %p39 = scmp.eq.s32.totalorder %s19, 0
    %p40 = por %p38, %p39
    %p41 = scmp.ne.s32.totalorder %s27, %s28
    %p42 = scmp.eq.s32.totalorder %s20, 1
    %p43 = por %p41, %p42
    %p45 = scmp.ne.s32.totalorder %s28, %s44
    %p46 = scmp.eq.s32.totalorder %s20, 0
    %p47 = por %p45, %p46
    %s48 = ssub.s32 %s14, %s21
    %p49 = scmp.eq.s32.totalorder %s48, 0
    %s51 = sadd.s32 %s50, 1
    %s52 = scalar_select %p49, %s50, %s51
    %p55 = pneg %p49
    %p56 = scmp.eq.s32.totalorder %s14, 1
    %p57 = por %p55, %p56
    %p58 = scmp.ne.s32.totalorder %s50, %s53
    %p59 = scmp.eq.s32.totalorder %s14, 0
    %p60 = por %p58, %p59
    %p61 = scmp.ne.s32.totalorder %s50, %s53
    %p62 = scmp.eq.s32.totalorder %s19, 1
    %p63 = por %p61, %p62
    %p64 = scmp.ne.s32.totalorder %s53, %s54
    %p65 = scmp.eq.s32.totalorder %s19, 0
    %p66 = por %p64, %p65
    %p67 = scmp.ne.s32.totalorder %s53, %s54
    %p68 = scmp.eq.s32.totalorder %s20, 1
    %p69 = por %p67, %p68
    %p71 = scmp.ne.s32.totalorder %s54, %s70
    %p72 = scmp.eq.s32.totalorder %s20, 0
    %p73 = por %p71, %p72
    %s75 = sadd.s32 %s74, 1
    %p78 = scmp.eq.s32.totalorder %s14, 1
    %p79 = scmp.ne.s32.totalorder %s74, %s76
    %p80 = scmp.eq.s32.totalorder %s14, 0
    %p81 = por %p79, %p80
    %p82 = scmp.ne.s32.totalorder %s74, %s76
    %p83 = scmp.eq.s32.totalorder %s19, 1
    %p84 = por %p82, %p83
    %p85 = scmp.ne.s32.totalorder %s76, %s77
    %p86 = scmp.eq.s32.totalorder %s19, 0
    %p87 = por %p85, %p86
    %p88 = scmp.ne.s32.totalorder %s76, %s77
    %p89 = scmp.eq.s32.totalorder %s20, 1
    %p90 = por %p88, %p89
    %p92 = scmp.ne.s32.totalorder %s77, %s91
    %p93 = scmp.eq.s32.totalorder %s20, 0
    %p94 = por %p92, %p93
    %s96 = sadd.s32 %s95, 1
    %p99 = scmp.eq.s32.totalorder %s14, 1
    %p100 = scmp.ne.s32.totalorder %s95, %s97
    %p101 = scmp.eq.s32.totalorder %s14, 0
    %p102 = por %p100, %p101
    %p103 = scmp.ne.s32.totalorder %s95, %s97
    %p104 = scmp.eq.s32.totalorder %s19, 1
    %p105 = por %p103, %p104
    %p106 = scmp.ne.s32.totalorder %s97, %s98
    %p107 = scmp.eq.s32.totalorder %s19, 0
    %p108 = por %p106, %p107
    %p109 = scmp.ne.s32.totalorder %s97, %s98
    %p110 = scmp.eq.s32.totalorder %s20, 1
    %p111 = por %p109, %p110
    %p113 = scmp.ne.s32.totalorder %s98, %s112
    %p114 = scmp.eq.s32.totalorder %s20, 0
    %p115 = por %p113, %p114
    %s117 = sadd.s32 %s116, 1
    %p120 = scmp.eq.s32.totalorder %s14, 1
    %p121 = scmp.ne.s32.totalorder %s116, %s118
    %p122 = scmp.eq.s32.totalorder %s14, 0
    %p123 = por %p121, %p122
    %p124 = scmp.ne.s32.totalorder %s116, %s118
    %p125 = scmp.eq.s32.totalorder %s19, 1
    %p126 = por %p124, %p125
    %p127 = scmp.ne.s32.totalorder %s118, %s119
    %p128 = scmp.eq.s32.totalorder %s19, 0
    %p129 = por %p127, %p128
    %p130 = scmp.ne.s32.totalorder %s118, %s119
    %p131 = scmp.eq.s32.totalorder %s20, 1
    %p132 = por %p130, %p131
    %p134 = scmp.ne.s32.totalorder %s119, %s133
    %p135 = scmp.eq.s32.totalorder %s20, 0
    %p136 = por %p134, %p135
    %s138 = sadd.s32 %s137, 1
    %p141 = scmp.eq.s32.totalorder %s14, 1
    %p142 = scmp.ne.s32.totalorder %s137, %s139
    %p143 = scmp.eq.s32.totalorder %s14, 0
    %p144 = por %p142, %p143
    %p145 = scmp.ne.s32.totalorder %s137, %s139
    %p146 = scmp.eq.s32.totalorder %s19, 1
    %p147 = por %p145, %p146
    %p148 = scmp.ne.s32.totalorder %s139, %s140
    %p149 = scmp.eq.s32.totalorder %s19, 0
    %p150 = por %p148, %p149
    %p151 = scmp.ne.s32.totalorder %s139, %s140
    %p152 = scmp.eq.s32.totalorder %s20, 1
    %p153 = por %p151, %p152
    %p155 = scmp.ne.s32.totalorder %s140, %s154
    %p156 = scmp.eq.s32.totalorder %s20, 0
    %p157 = por %p155, %p156
    %s159 = sadd.s32 %s158, 1
    %p162 = scmp.eq.s32.totalorder %s14, 1
    %p163 = scmp.ne.s32.totalorder %s158, %s160
    %p164 = scmp.eq.s32.totalorder %s14, 0
    %p165 = por %p163, %p164
    %p166 = scmp.ne.s32.totalorder %s158, %s160
    %p167 = scmp.eq.s32.totalorder %s19, 1
    %p168 = por %p166, %p167
    %p169 = scmp.ne.s32.totalorder %s160, %s161
    %p170 = scmp.eq.s32.totalorder %s19, 0
    %p171 = por %p169, %p170
    %p172 = scmp.ne.s32.totalorder %s160, %s161
    %p173 = scmp.eq.s32.totalorder %s20, 1
    %p174 = por %p172, %p173
    %p176 = scmp.ne.s32.totalorder %s161, %s175
    %p177 = scmp.eq.s32.totalorder %s20, 0
    %p178 = por %p176, %p177
    %s180 = sadd.s32 %s179, 1
    %p183 = scmp.eq.s32.totalorder %s14, 1
    %p184 = scmp.ne.s32.totalorder %s179, %s181
    %p185 = scmp.eq.s32.totalorder %s14, 0
    %p186 = por %p184, %p185
    %p187 = scmp.ne.s32.totalorder %s179, %s181
    %p188 = scmp.eq.s32.totalorder %s19, 1
    %p189 = por %p187, %p188
    %p190 = scmp.ne.s32.totalorder %s181, %s182
    %p191 = scmp.eq.s32.totalorder %s19, 0
    %p192 = por %p190, %p191
    %p193 = scmp.ne.s32.totalorder %s181, %s182
    %p194 = scmp.eq.s32.totalorder %s20, 1
    %p195 = por %p193, %p194
    %p197 = scmp.ne.s32.totalorder %s182, %s196
    %p198 = scmp.eq.s32.totalorder %s20, 0
    %p199 = por %p197, %p198
    %s200 = ssub.s32 %s14, %s21
    %p201 = scmp.eq.s32.totalorder %s200, 0
    %s203 = sadd.s32 %s202, 1
    %s204 = scalar_select %p201, %s202, %s203
    %p207 = pneg %p201
    %p208 = scmp.eq.s32.totalorder %s14, 1
    %p209 = por %p207, %p208
    %p210 = scmp.ne.s32.totalorder %s202, %s205
    %p211 = scmp.eq.s32.totalorder %s14, 0
    %p212 = por %p210, %p211
    %p213 = scmp.ne.s32.totalorder %s202, %s205
    %p214 = scmp.eq.s32.totalorder %s19, 1
    %p215 = por %p213, %p214
    %p216 = scmp.ne.s32.totalorder %s205, %s206
    %p217 = scmp.eq.s32.totalorder %s19, 0
    %p218 = por %p216, %p217
    %p219 = scmp.ne.s32.totalorder %s205, %s206
    %p220 = scmp.eq.s32.totalorder %s20, 1
    %p221 = por %p219, %p220
    %p223 = scmp.ne.s32.totalorder %s206, %s222
    %p224 = scmp.eq.s32.totalorder %s20, 0
    %p225 = por %p223, %p224
    %p226 = scmp.le.s32.totalorder 1, %s14
    %p227 = scmp.lt.s32.totalorder %s14, 3
    %p228 = pnand %p226, %p227
    %p229 = pneg %p228
    // Predicated region
    $region9: #{shuffle_block_forward.1} parent=5 // pred_check
      _
    $region10: #{shuffle_block_forward.1} parent=5 // pred_check_branch
      %231 = sbr.rel (%p228) target = $region12
    $region11: #{shuffle_block_forward.1} parent=5 // pred_region
      %s232 = ssub.s32 %s14, 1
      // Predicated region
      $region13: #{shuffle_block_forward.1} parent=11 // pred_check
        %p233 = pneg %p87
      $region14: #{shuffle_block_forward.1} parent=11 // pred_check_branch
        %235 = sbr.rel (%p233) target = $region16
      $region15: #{shuffle_block_forward.1} parent=11 // pred_region
        _
      $region16: #{shuffle_block_forward.1} parent=11 // pred_fallthru
        _
      // Predicated region
      $region17: #{shuffle_block_forward.1} parent=11 // pred_check
        %p236 = pneg %p108
      $region18: #{shuffle_block_forward.1} parent=11 // pred_check_branch
        %238 = sbr.rel (%p236) target = $region20
      $region19: #{shuffle_block_forward.1} parent=11 // pred_region
        _
      $region20: #{shuffle_block_forward.1} parent=11 // pred_fallthru
        _
      // Predicated region
      $region21: #{shuffle_block_forward.1} parent=11 // pred_check
        %p239 = pneg %p129
      $region22: #{shuffle_block_forward.1} parent=11 // pred_check_branch
        %241 = sbr.rel (%p239) target = $region24
      $region23: #{shuffle_block_forward.1} parent=11 // pred_region
        _
      $region24: #{shuffle_block_forward.1} parent=11 // pred_fallthru
        _
      // Predicated region
      $region25: #{shuffle_block_forward.1} parent=11 // pred_check
        %p242 = pneg %p150
      $region26: #{shuffle_block_forward.1} parent=11 // pred_check_branch
        %244 = sbr.rel (%p242) target = $region28
      $region27: #{shuffle_block_forward.1} parent=11 // pred_region
        _
      $region28: #{shuffle_block_forward.1} parent=11 // pred_fallthru
        _
      // Predicated region
      $region29: #{shuffle_block_forward.1} parent=11 // pred_check
        %p245 = pneg %p171
      $region30: #{shuffle_block_forward.1} parent=11 // pred_check_branch
        %247 = sbr.rel (%p245) target = $region32
      $region31: #{shuffle_block_forward.1} parent=11 // pred_region
        _
      $region32: #{shuffle_block_forward.1} parent=11 // pred_fallthru
        _
      // Predicated region
      $region33: #{shuffle_block_forward.1} parent=11 // pred_check
        %p248 = pneg %p192
      $region34: #{shuffle_block_forward.1} parent=11 // pred_check_branch
        %250 = sbr.rel (%p248) target = $region36
      $region35: #{shuffle_block_forward.1} parent=11 // pred_region
        _
      $region36: #{shuffle_block_forward.1} parent=11 // pred_fallthru
        _
    $region12: #{shuffle_block_forward.1} parent=5 // pred_fallthru
      _
    %p251 = scmp.lt.s32.totalorder %s14, 2
    // Predicated region
    $region37: #{shuffle_block_forward.1} parent=5 // pred_check
      %p252 = pneg %p251
    $region38: #{shuffle_block_forward.1} parent=5 // pred_check_branch
      %254 = sbr.rel (%p252) target = $region40
    $region39: #{shuffle_block_forward.1} parent=5 // pred_region
      // Predicated region
      $region41: #{shuffle_block_forward.1} parent=39 // pred_check
        %p255 = pneg %p34
      $region42: #{shuffle_block_forward.1} parent=39 // pred_check_branch
        %257 = sbr.rel (%p255) target = $region44
      $region43: #{shuffle_block_forward.1} parent=39 // pred_region
        %p258 = scmp.lt.s32.totalorder %s14, 1
        %s259 = scalar_select %p258, %s14, 1
        %s260 = smul.addr %s259, 2
        %s261 = smul.addr %s260, 8
        %s262 = scalar_lea.vmem %s0, %s261
      $region44: #{shuffle_block_forward.1} parent=39 // pred_fallthru
        _
      // Predicated region
      $region45: #{shuffle_block_forward.1} parent=39 // pred_check
        %p263 = pneg %p60
      $region46: #{shuffle_block_forward.1} parent=39 // pred_check_branch
        %265 = sbr.rel (%p263) target = $region48
      $region47: #{shuffle_block_forward.1} parent=39 // pred_region
        %p266 = scmp.lt.s32.totalorder %s14, 1
        %s267 = scalar_select %p266, %s14, 1
        %s268 = smul.addr %s267, 2
        %s269 = smul.addr %s268, 8
        %s270 = scalar_lea.vmem %s1, %s269
      $region48: #{shuffle_block_forward.1} parent=39 // pred_fallthru
        _
    $region40: #{shuffle_block_forward.1} parent=5 // pred_fallthru
      _
    %p271 = scmp.le.s32.totalorder 1, %s14
    %p272 = scmp.lt.s32.totalorder %s14, 3
    %p273 = pnand %p271, %p272
    %p274 = pneg %p273
    // Predicated region
    $region49: #{shuffle_block_forward.1} parent=5 // pred_check
      _
    $region50: #{shuffle_block_forward.1} parent=5 // pred_check_branch
      %276 = sbr.rel (%p273) target = $region52
    $region51: #{shuffle_block_forward.1} parent=5 // pred_region
      %s277 = ssub.s32 %s14, 1
      %p278 = scmp.lt.s32.totalorder %s19, 1
      %s279 = scalar_select %p278, %s19, 1
      %s280 = smul.addr %s279, 2
      %s281 = smul.addr %s280, 8
      %s282 = scalar_lea.vmem %s0, %s281
      %p283 = pneg %p40
      %p284 = pneg %p37
      %p285 = scmp.lt.s32.totalorder %s19, 1
      %s286 = scalar_select %p285, %s19, 1
      %s287 = smul.addr %s286, 2
      %s288 = smul.addr %s287, 8
      %s289 = scalar_lea.vmem %s1, %s288
      %p290 = pneg %p66
      %p291 = pneg %p63
      %p292 = pneg %p87
      %p293 = pneg %p84
      %p294 = pneg %p108
      %p295 = pneg %p105
      %p296 = pneg %p129
      %p297 = pneg %p126
      %p298 = pneg %p150
      %p299 = pneg %p147
      %p300 = pneg %p171
      %p301 = pneg %p168
      %p302 = pneg %p192
      %p303 = pneg %p189
      %p304 = pneg %p218
      %p305 = pneg %p215
      %p306 = scmp.lt.s32.totalorder %s19, 1
      %s307 = scalar_select %p306, %s19, 1
      %s308 = smul.addr %s307, 4
      %s309 = smul.addr %s308, 8
      %s310 = scalar_lea.vmem %s8, %s309
      %p311 = scmp.lt.s32.totalorder %s19, 1
      %s312 = scalar_select %p311, %s19, 1
      %s313 = smul.addr %s312, 2
      %s314 = smul.addr %s313, 8
      %s315 = scalar_lea.vmem %s0, %s314
      %p316 = scmp.lt.s32.totalorder %s19, 1
      %s317 = scalar_select %p316, %s19, 1
      %s318 = smul.addr %s317, 2
      %s319 = smul.addr %s318, 8
      %s320 = scalar_lea.vmem %s1, %s319
      %p321 = scmp.lt.s32.totalorder %s19, 1
      %s322 = scalar_select %p321, %s19, 1
      %s323 = smul.addr %s322, 4
      %s324 = smul.addr %s323, 8
      %s325 = scalar_lea.vmem %s8, %s324
      %v326 = vld [vmem:[%s320] sm:$0xff]
      %v327 = vld [vmem:[%s320 + $0x8] sm:$0xff]
      %v328 = vld [vmem:[%s2] sm:$0xff]
      %v329 = vld [vmem:[%s2 + $0x8] sm:$0xff]
      %v330 = vld [vmem:[%s2 + $0x10] sm:$0xff]
      %v331 = vld [vmem:[%s2 + $0x18] sm:$0xff]
      %v332 = vld [vmem:[%s2 + $0x20] sm:$0xff]
      %v333 = vld [vmem:[%s2 + $0x28] sm:$0xff]
      %v334 = vld [vmem:[%s2 + $0x30] sm:$0xff]
      %v335 = vld [vmem:[%s2 + $0x38] sm:$0xff]
      %v336 = vld [vmem:[%s2 + $0x40] sm:$0xff]
      %v337 = vld [vmem:[%s2 + $0x48] sm:$0xff]
      %v338 = vld [vmem:[%s2 + $0x50] sm:$0xff]
      %v339 = vld [vmem:[%s2 + $0x58] sm:$0xff]
      %v340 = vld [vmem:[%s2 + $0x60] sm:$0xff]
      %v341 = vld [vmem:[%s2 + $0x68] sm:$0xff]
      %v342 = vld [vmem:[%s2 + $0x70] sm:$0xff]
      %v343 = vld [vmem:[%s2 + $0x78] sm:$0xff]
      %344 = vmatpush.msra.mxu0 %v343
      %345 = vmatpush.msra.mxu0 %v342
      %346 = vmatpush.msra.mxu0 %v341
      %347 = vmatpush.msra.mxu0 %v340
      %348 = vmatpush.msra.mxu0 %v339
      %349 = vmatpush.msra.mxu0 %v338
      %350 = vmatpush.msra.mxu0 %v337
      %351 = vmatpush.msra.mxu0 %v336
      %352 = vmatpush.msra.mxu0 %v335
      %353 = vmatpush.msra.mxu0 %v334
      %354 = vmatpush.msra.mxu0 %v333
      %355 = vmatpush.msra.mxu0 %v332
      %356 = vmatpush.msra.mxu0 %v331
      %357 = vmatpush.msra.mxu0 %v330
      %358 = vmatpush.msra.mxu0 %v329
      %359 = vmatpush.msra.mxu0 %v328
      %360 = vmatmul.f32.gmra.mxu0 %v326
      %v361 = vpop.f32.mrf.mxu0
      %v362 = vadd.f32 0.0, %v361
      %363 = vmatmul.f32.gmra.mxu0 %v327
      %v364 = vpop.f32.mrf.mxu0
      %v365 = vadd.f32 0.0, %v364
      %366 = vdwg.mxu0
      %v367 = vld [vmem:[%s6] sm:$0x1]
      %v368 = vperm.slane %v367, 0
      %v369 = vmul.f32 %v362, %v368
      %v370 = vmul.f32 %v365, %v368
      %v371 = vld [vmem:[%s6 + $0x1] sm:$0x1]
      %v372 = vperm.slane %v371, 0
      %v373 = vadd.f32 %v369, %v372
      %v374 = vadd.f32 %v370, %v372
      %v375 = vmax.f32 %v373, 0.0
      %v376 = vmax.f32 %v374, 0.0
      %v377 = vld [vmem:[%s4] sm:$0xff]
      %v378 = vld [vmem:[%s4 + $0x8] sm:$0xff]
      %v379 = vld [vmem:[%s4 + $0x10] sm:$0xff]
      %v380 = vld [vmem:[%s4 + $0x18] sm:$0xff]
      %v381 = vld [vmem:[%s4 + $0x20] sm:$0xff]
      %v382 = vld [vmem:[%s4 + $0x28] sm:$0xff]
      %v383 = vld [vmem:[%s4 + $0x30] sm:$0xff]
      %v384 = vld [vmem:[%s4 + $0x38] sm:$0xff]
      %v385 = vld [vmem:[%s4 + $0x40] sm:$0xff]
      %v386 = vld [vmem:[%s4 + $0x48] sm:$0xff]
      %v387 = vld [vmem:[%s4 + $0x50] sm:$0xff]
      %v388 = vld [vmem:[%s4 + $0x58] sm:$0xff]
      %v389 = vld [vmem:[%s4 + $0x60] sm:$0xff]
      %v390 = vld [vmem:[%s4 + $0x68] sm:$0xff]
      %v391 = vld [vmem:[%s4 + $0x70] sm:$0xff]
      %v392 = vld [vmem:[%s4 + $0x78] sm:$0xff]
      %393 = vmatpush.msra.mxu0 %v392
      %394 = vmatpush.msra.mxu0 %v391
      %395 = vmatpush.msra.mxu0 %v390
      %396 = vmatpush.msra.mxu0 %v389
      %397 = vmatpush.msra.mxu0 %v388
      %398 = vmatpush.msra.mxu0 %v387
      %399 = vmatpush.msra.mxu0 %v386
      %400 = vmatpush.msra.mxu0 %v385
      %401 = vmatpush.msra.mxu0 %v384
      %402 = vmatpush.msra.mxu0 %v383
      %403 = vmatpush.msra.mxu0 %v382
      %404 = vmatpush.msra.mxu0 %v381
      %405 = vmatpush.msra.mxu0 %v380
      %406 = vmatpush.msra.mxu0 %v379
      %407 = vmatpush.msra.mxu0 %v378
      %408 = vmatpush.msra.mxu0 %v377
      %409 = vmatmul.f32.gmra.mxu0 %v375
      %v410 = vpop.f32.mrf.mxu0
      %v411 = vadd.f32 0.0, %v410
      %412 = vmatmul.f32.gmra.mxu0 %v376
      %v413 = vpop.f32.mrf.mxu0
      %v414 = vadd.f32 0.0, %v413
      %415 = vdwg.mxu0
      %s416 = scalar_lea.vmem %s4, 128
      %v417 = vld [vmem:[%s416] sm:$0xff]
      %v418 = vld [vmem:[%s416 + $0x8] sm:$0xff]
      %v419 = vld [vmem:[%s416 + $0x10] sm:$0xff]
      %v420 = vld [vmem:[%s416 + $0x18] sm:$0xff]
      %v421 = vld [vmem:[%s416 + $0x20] sm:$0xff]
      %v422 = vld [vmem:[%s416 + $0x28] sm:$0xff]
      %v423 = vld [vmem:[%s416 + $0x30] sm:$0xff]
      %v424 = vld [vmem:[%s416 + $0x38] sm:$0xff]
      %v425 = vld [vmem:[%s416 + $0x40] sm:$0xff]
      %v426 = vld [vmem:[%s416 + $0x48] sm:$0xff]
      %v427 = vld [vmem:[%s416 + $0x50] sm:$0xff]
      %v428 = vld [vmem:[%s416 + $0x58] sm:$0xff]
      %v429 = vld [vmem:[%s416 + $0x60] sm:$0xff]
      %v430 = vld [vmem:[%s416 + $0x68] sm:$0xff]
      %v431 = vld [vmem:[%s416 + $0x70] sm:$0xff]
      %v432 = vld [vmem:[%s416 + $0x78] sm:$0xff]
      %433 = vmatpush.msra.mxu0 %v432
      %434 = vmatpush.msra.mxu0 %v431
      %435 = vmatpush.msra.mxu0 %v430
      %436 = vmatpush.msra.mxu0 %v429
      %437 = vmatpush.msra.mxu0 %v428
      %438 = vmatpush.msra.mxu0 %v427
      %439 = vmatpush.msra.mxu0 %v426
      %440 = vmatpush.msra.mxu0 %v425
      %441 = vmatpush.msra.mxu0 %v424
      %442 = vmatpush.msra.mxu0 %v423
      %443 = vmatpush.msra.mxu0 %v422
      %444 = vmatpush.msra.mxu0 %v421
      %445 = vmatpush.msra.mxu0 %v420
      %446 = vmatpush.msra.mxu0 %v419
      %447 = vmatpush.msra.mxu0 %v418
      %448 = vmatpush.msra.mxu0 %v417
      %449 = vmatmul.f32.gmra.mxu0 %v375
      %v450 = vpop.f32.mrf.mxu0
      %v451 = vadd.f32 0.0, %v450
      %452 = vmatmul.f32.gmra.mxu0 %v376
      %v453 = vpop.f32.mrf.mxu0
      %v454 = vadd.f32 0.0, %v453
      %455 = vdwg.mxu0
      %s456 = scalar_lea.vmem %s4, 256
      %v457 = vld [vmem:[%s456] sm:$0xff]
      %v458 = vld [vmem:[%s456 + $0x8] sm:$0xff]
      %v459 = vld [vmem:[%s456 + $0x10] sm:$0xff]
      %v460 = vld [vmem:[%s456 + $0x18] sm:$0xff]
      %v461 = vld [vmem:[%s456 + $0x20] sm:$0xff]
      %v462 = vld [vmem:[%s456 + $0x28] sm:$0xff]
      %v463 = vld [vmem:[%s456 + $0x30] sm:$0xff]
      %v464 = vld [vmem:[%s456 + $0x38] sm:$0xff]
      %v465 = vld [vmem:[%s456 + $0x40] sm:$0xff]
      %v466 = vld [vmem:[%s456 + $0x48] sm:$0xff]
      %v467 = vld [vmem:[%s456 + $0x50] sm:$0xff]
      %v468 = vld [vmem:[%s456 + $0x58] sm:$0xff]
      %v469 = vld [vmem:[%s456 + $0x60] sm:$0xff]
      %v470 = vld [vmem:[%s456 + $0x68] sm:$0xff]
      %v471 = vld [vmem:[%s456 + $0x70] sm:$0xff]
      %v472 = vld [vmem:[%s456 + $0x78] sm:$0xff]
      %473 = vmatpush.msra.mxu0 %v472
      %474 = vmatpush.msra.mxu0 %v471
      %475 = vmatpush.msra.mxu0 %v470
      %476 = vmatpush.msra.mxu0 %v469
      %477 = vmatpush.msra.mxu0 %v468
      %478 = vmatpush.msra.mxu0 %v467
      %479 = vmatpush.msra.mxu0 %v466
      %480 = vmatpush.msra.mxu0 %v465
      %481 = vmatpush.msra.mxu0 %v464
      %482 = vmatpush.msra.mxu0 %v463
      %483 = vmatpush.msra.mxu0 %v462
      %484 = vmatpush.msra.mxu0 %v461
      %485 = vmatpush.msra.mxu0 %v460
      %486 = vmatpush.msra.mxu0 %v459
      %487 = vmatpush.msra.mxu0 %v458
      %488 = vmatpush.msra.mxu0 %v457
      %489 = vmatmul.f32.gmra.mxu0 %v375
      %v490 = vpop.f32.mrf.mxu0
      %v491 = vadd.f32 0.0, %v490
      %492 = vmatmul.f32.gmra.mxu0 %v376
      %v493 = vpop.f32.mrf.mxu0
      %v494 = vadd.f32 0.0, %v493
      %495 = vdwg.mxu0
      %v496 = vld [vmem:[%s5] sm:$0xff]
      %v497 = vld [vmem:[%s5 + $0x8] sm:$0xff]
      %vm498 = vcmask 130048
      %v500 = vsel %vm498, %v496, 0
      %v503 = vsel %vm498, %v497, 0
      %505 = vmatpush.msra.mxu0 0.0
      %506 = vmatpush.msra.mxu0 0.0
      %507 = vmatpush.msra.mxu0 0.0
      %508 = vmatpush.msra.mxu0 0.0
      %509 = vmatpush.msra.mxu0 0.0
      %510 = vmatpush.msra.mxu0 0.0
      %511 = vmatpush.msra.mxu0 0.0
      %512 = vmatpush.msra.mxu0 0.0
      %513 = vmatpush.msra.mxu0 0.0
      %514 = vmatpush.msra.mxu0 0.0
      %515 = vmatpush.msra.mxu0 0.0
      %516 = vmatpush.msra.mxu0 0.0
      %517 = vmatpush.msra.mxu0 0.0
      %518 = vmatpush.msra.mxu0 0.0
      %519 = vmatpush.msra.mxu0 %v414
      %520 = vmatpush.msra.mxu0 %v411
      %521 = vmatmul.f32.gmra.mxu0 %v500
      %v522 = vpop.f32.mrf.mxu0
      %v523 = vadd.f32 %v451, %v522
      %524 = vmatmul.f32.gmra.mxu0 %v503
      %v525 = vpop.f32.mrf.mxu0
      %v526 = vadd.f32 %v454, %v525
      %527 = vdwg.mxu0
      %s528 = scalar_lea.vmem %s5, 16
      %v529 = vld [vmem:[%s528] sm:$0xff]
      %v530 = vld [vmem:[%s528 + $0x8] sm:$0xff]
      %v532 = vsel %vm498, %v529, 0
      %v535 = vsel %vm498, %v530, 0
      %537 = vmatpush.msra.mxu0 0.0
      %538 = vmatpush.msra.mxu0 0.0
      %539 = vmatpush.msra.mxu0 0.0
      %540 = vmatpush.msra.mxu0 0.0
      %541 = vmatpush.msra.mxu0 0.0
      %542 = vmatpush.msra.mxu0 0.0
      %543 = vmatpush.msra.mxu0 0.0
      %544 = vmatpush.msra.mxu0 0.0
      %545 = vmatpush.msra.mxu0 0.0
      %546 = vmatpush.msra.mxu0 0.0
      %547 = vmatpush.msra.mxu0 0.0
      %548 = vmatpush.msra.mxu0 0.0
      %549 = vmatpush.msra.mxu0 0.0
      %550 = vmatpush.msra.mxu0 0.0
      %551 = vmatpush.msra.mxu0 %v494
      %552 = vmatpush.msra.mxu0 %v491
      %553 = vmatmul.f32.gmra.mxu0 %v532
      %v554 = vpop.f32.mrf.mxu0
      %v555 = vadd.f32 0.0, %v554
      %556 = vmatmul.f32.gmra.mxu0 %v535
      %v557 = vpop.f32.mrf.mxu0
      %v558 = vadd.f32 0.0, %v557
      %559 = vdwg.mxu0
      %v560 = vadd.f32 %v523, %v555
      %v561 = vadd.f32 %v526, %v558
      %v562 = vld [vmem:[%s6 + $0x2] sm:$0x1]
      %v563 = vperm.slane %v562, 0
      %v564 = vmul.f32 %v560, %v563
      %v565 = vmul.f32 %v561, %v563
      %v566 = vld [vmem:[%s6 + $0x3] sm:$0x1]
      %v567 = vperm.slane %v566, 0
      %v568 = vadd.f32 %v564, %v567
      %v569 = vadd.f32 %v565, %v567
      %v570 = vmax.f32 %v568, 0.0
      %v571 = vmax.f32 %v569, 0.0
      %v572 = vld [vmem:[%s3] sm:$0xff]
      %v573 = vld [vmem:[%s3 + $0x8] sm:$0xff]
      %v574 = vld [vmem:[%s3 + $0x10] sm:$0xff]
      %v575 = vld [vmem:[%s3 + $0x18] sm:$0xff]
      %v576 = vld [vmem:[%s3 + $0x20] sm:$0xff]
      %v577 = vld [vmem:[%s3 + $0x28] sm:$0xff]
      %v578 = vld [vmem:[%s3 + $0x30] sm:$0xff]
      %v579 = vld [vmem:[%s3 + $0x38] sm:$0xff]
      %v580 = vld [vmem:[%s3 + $0x40] sm:$0xff]
      %v581 = vld [vmem:[%s3 + $0x48] sm:$0xff]
      %v582 = vld [vmem:[%s3 + $0x50] sm:$0xff]
      %v583 = vld [vmem:[%s3 + $0x58] sm:$0xff]
      %v584 = vld [vmem:[%s3 + $0x60] sm:$0xff]
      %v585 = vld [vmem:[%s3 + $0x68] sm:$0xff]
      %v586 = vld [vmem:[%s3 + $0x70] sm:$0xff]
      %v587 = vld [vmem:[%s3 + $0x78] sm:$0xff]
      %588 = vmatpush.msra.mxu0 %v587
      %589 = vmatpush.msra.mxu0 %v586
      %590 = vmatpush.msra.mxu0 %v585
      %591 = vmatpush.msra.mxu0 %v584
      %592 = vmatpush.msra.mxu0 %v583
      %593 = vmatpush.msra.mxu0 %v582
      %594 = vmatpush.msra.mxu0 %v581
      %595 = vmatpush.msra.mxu0 %v580
      %596 = vmatpush.msra.mxu0 %v579
      %597 = vmatpush.msra.mxu0 %v578
      %598 = vmatpush.msra.mxu0 %v577
      %599 = vmatpush.msra.mxu0 %v576
      %600 = vmatpush.msra.mxu0 %v575
      %601 = vmatpush.msra.mxu0 %v574
      %602 = vmatpush.msra.mxu0 %v573
      %603 = vmatpush.msra.mxu0 %v572
      %604 = vmatmul.f32.gmra.mxu0 %v570
      %v605 = vpop.f32.mrf.mxu0
      %v606 = vadd.f32 0.0, %v605
      %607 = vmatmul.f32.gmra.mxu0 %v571
      %v608 = vpop.f32.mrf.mxu0
      %v609 = vadd.f32 0.0, %v608
      %610 = vdwg.mxu0
      %v611 = vld [vmem:[%s6 + $0x4] sm:$0x1]
      %v612 = vperm.slane %v611, 0
      %v613 = vmul.f32 %v606, %v612
      %v614 = vmul.f32 %v609, %v612
      %v615 = vld [vmem:[%s6 + $0x5] sm:$0x1]
      %v616 = vperm.slane %v615, 0
      %v617 = vadd.f32 %v613, %v616
      %v618 = vadd.f32 %v614, %v616
      %v619 = vmax.f32 %v617, 0.0
      %v620 = vmax.f32 %v618, 0.0
      %v621 = vld [vmem:[%s315] sm:$0xff]
      %v622 = vld [vmem:[%s315 + $0x8] sm:$0xff]
      %v623 = vld [vmem:[%s7] sm:$0xff]
      %v624 = vld [vmem:[%s7 + $0x8] sm:$0xff]
      %v625 = vld [vmem:[%s7 + $0x10] sm:$0xff]
      %v626 = vld [vmem:[%s7 + $0x18] sm:$0xff]
      %v627 = vld [vmem:[%s7 + $0x20] sm:$0xff]
      %v628 = vld [vmem:[%s7 + $0x28] sm:$0xff]
      %v629 = vld [vmem:[%s7 + $0x30] sm:$0xff]
      %v630 = vld [vmem:[%s7 + $0x38] sm:$0xff]
      %v631 = vld [vmem:[%s7 + $0x40] sm:$0xff]
      %v632 = vld [vmem:[%s7 + $0x48] sm:$0xff]
      %v633 = vld [vmem:[%s7 + $0x50] sm:$0xff]
      %v634 = vld [vmem:[%s7 + $0x58] sm:$0xff]
      %v635 = vld [vmem:[%s7 + $0x60] sm:$0xff]
      %v636 = vld [vmem:[%s7 + $0x68] sm:$0xff]
      %v637 = vld [vmem:[%s7 + $0x70] sm:$0xff]
      %v638 = vld [vmem:[%s7 + $0x78] sm:$0xff]
      %v639 = vld [vmem:[%s7 + $0x80] sm:$0xff]
      %v640 = vld [vmem:[%s7 + $0x88] sm:$0xff]
      %v641 = vld [vmem:[%s7 + $0x90] sm:$0xff]
      %v642 = vld [vmem:[%s7 + $0x98] sm:$0xff]
      %v643 = vld [vmem:[%s7 + $0xa0] sm:$0xff]
      %v644 = vld [vmem:[%s7 + $0xa8] sm:$0xff]
      %v645 = vld [vmem:[%s7 + $0xb0] sm:$0xff]
      %v646 = vld [vmem:[%s7 + $0xb8] sm:$0xff]
      %v647 = vld [vmem:[%s7 + $0xc0] sm:$0xff]
      %v648 = vld [vmem:[%s7 + $0xc8] sm:$0xff]
      %v649 = vld [vmem:[%s7 + $0xd0] sm:$0xff]
      %v650 = vld [vmem:[%s7 + $0xd8] sm:$0xff]
      %v651 = vld [vmem:[%s7 + $0xe0] sm:$0xff]
      %v652 = vld [vmem:[%s7 + $0xe8] sm:$0xff]
      %v653 = vld [vmem:[%s7 + $0xf0] sm:$0xff]
      %v654 = vld [vmem:[%s7 + $0xf8] sm:$0xff]
      %s655 = scalar_lea.vmem %s7, 256
      %v656 = vld [vmem:[%s655] sm:$0xff]
      %v657 = vld [vmem:[%s655 + $0x8] sm:$0xff]
      %v658 = vld [vmem:[%s655 + $0x10] sm:$0xff]
      %v659 = vld [vmem:[%s655 + $0x18] sm:$0xff]
      %v660 = vld [vmem:[%s655 + $0x20] sm:$0xff]
      %v661 = vld [vmem:[%s655 + $0x28] sm:$0xff]
      %v662 = vld [vmem:[%s655 + $0x30] sm:$0xff]
      %v663 = vld [vmem:[%s655 + $0x38] sm:$0xff]
      %v664 = vld [vmem:[%s655 + $0x40] sm:$0xff]
      %v665 = vld [vmem:[%s655 + $0x48] sm:$0xff]
      %v666 = vld [vmem:[%s655 + $0x50] sm:$0xff]
      %v667 = vld [vmem:[%s655 + $0x58] sm:$0xff]
      %v668 = vld [vmem:[%s655 + $0x60] sm:$0xff]
      %v669 = vld [vmem:[%s655 + $0x68] sm:$0xff]
      %v670 = vld [vmem:[%s655 + $0x70] sm:$0xff]
      %v671 = vld [vmem:[%s655 + $0x78] sm:$0xff]
      %v672 = vld [vmem:[%s655 + $0x80] sm:$0xff]
      %v673 = vld [vmem:[%s655 + $0x88] sm:$0xff]
      %v674 = vld [vmem:[%s655 + $0x90] sm:$0xff]
      %v675 = vld [vmem:[%s655 + $0x98] sm:$0xff]
      %v676 = vld [vmem:[%s655 + $0xa0] sm:$0xff]
      %v677 = vld [vmem:[%s655 + $0xa8] sm:$0xff]
      %v678 = vld [vmem:[%s655 + $0xb0] sm:$0xff]
      %v679 = vld [vmem:[%s655 + $0xb8] sm:$0xff]
      %v680 = vld [vmem:[%s655 + $0xc0] sm:$0xff]
      %v681 = vld [vmem:[%s655 + $0xc8] sm:$0xff]
      %v682 = vld [vmem:[%s655 + $0xd0] sm:$0xff]
      %v683 = vld [vmem:[%s655 + $0xd8] sm:$0xff]
      %v684 = vld [vmem:[%s655 + $0xe0] sm:$0xff]
      %v685 = vld [vmem:[%s655 + $0xe8] sm:$0xff]
      %v686 = vld [vmem:[%s655 + $0xf0] sm:$0xff]
      %v687 = vld [vmem:[%s655 + $0xf8] sm:$0xff]
      %688 = vmatpush.msra.mxu0 %v686
      %689 = vmatpush.msra.mxu0 %v684
      %690 = vmatpush.msra.mxu0 %v682
      %691 = vmatpush.msra.mxu0 %v680
      %692 = vmatpush.msra.mxu0 %v678
      %693 = vmatpush.msra.mxu0 %v676
      %694 = vmatpush.msra.mxu0 %v674
      %695 = vmatpush.msra.mxu0 %v672
      %696 = vmatpush.msra.mxu0 %v670
      %697 = vmatpush.msra.mxu0 %v668
      %698 = vmatpush.msra.mxu0 %v666
      %699 = vmatpush.msra.mxu0 %v664
      %700 = vmatpush.msra.mxu0 %v662
      %701 = vmatpush.msra.mxu0 %v660
      %702 = vmatpush.msra.mxu0 %v658
      %703 = vmatpush.msra.mxu0 %v656
      %704 = vmatmul.f32.gmra.mxu0 %v619
      %v705 = vpop.f32.mrf.mxu0
      %v706 = vadd.f32 0.0, %v705
      %707 = vmatmul.f32.gmra.mxu0 %v620
      %v708 = vpop.f32.mrf.mxu0
      %v709 = vadd.f32 0.0, %v708
      %710 = vdwg.mxu0
      %711 = vmatpush.msra.mxu0 %v687
      %712 = vmatpush.msra.mxu0 %v685
      %713 = vmatpush.msra.mxu0 %v683
      %714 = vmatpush.msra.mxu0 %v681
      %715 = vmatpush.msra.mxu0 %v679
      %716 = vmatpush.msra.mxu0 %v677
      %717 = vmatpush.msra.mxu0 %v675
      %718 = vmatpush.msra.mxu0 %v673
      %719 = vmatpush.msra.mxu0 %v671
      %720 = vmatpush.msra.mxu0 %v669
      %721 = vmatpush.msra.mxu0 %v667
      %722 = vmatpush.msra.mxu0 %v665
      %723 = vmatpush.msra.mxu0 %v663
      %724 = vmatpush.msra.mxu0 %v661
      %725 = vmatpush.msra.mxu0 %v659
      %726 = vmatpush.msra.mxu0 %v657
      %727 = vmatmul.f32.gmra.mxu0 %v619
      %v728 = vpop.f32.mrf.mxu0
      %v729 = vadd.f32 0.0, %v728
      %730 = vmatmul.f32.gmra.mxu0 %v620
      %v731 = vpop.f32.mrf.mxu0
      %v732 = vadd.f32 0.0, %v731
      %733 = vdwg.mxu0
      %734 = vmatpush.msra.mxu0 %v653
      %735 = vmatpush.msra.mxu0 %v651
      %736 = vmatpush.msra.mxu0 %v649
      %737 = vmatpush.msra.mxu0 %v647
      %738 = vmatpush.msra.mxu0 %v645
      %739 = vmatpush.msra.mxu0 %v643
      %740 = vmatpush.msra.mxu0 %v641
      %741 = vmatpush.msra.mxu0 %v639
      %742 = vmatpush.msra.mxu0 %v637
      %743 = vmatpush.msra.mxu0 %v635
      %744 = vmatpush.msra.mxu0 %v633
      %745 = vmatpush.msra.mxu0 %v631
      %746 = vmatpush.msra.mxu0 %v629
      %747 = vmatpush.msra.mxu0 %v627
      %748 = vmatpush.msra.mxu0 %v625
      %749 = vmatpush.msra.mxu0 %v623
      %750 = vmatmul.f32.gmra.mxu0 %v621
      %v751 = vpop.f32.mrf.mxu0
      %v752 = vadd.f32 %v706, %v751
      %753 = vmatmul.f32.gmra.mxu0 %v622
      %v754 = vpop.f32.mrf.mxu0
      %v755 = vadd.f32 %v709, %v754
      %756 = vdwg.mxu0
      %757 = vmatpush.msra.mxu0 %v654
      %758 = vmatpush.msra.mxu0 %v652
      %759 = vmatpush.msra.mxu0 %v650
      %760 = vmatpush.msra.mxu0 %v648
      %761 = vmatpush.msra.mxu0 %v646
      %762 = vmatpush.msra.mxu0 %v644
      %763 = vmatpush.msra.mxu0 %v642
      %764 = vmatpush.msra.mxu0 %v640
      %765 = vmatpush.msra.mxu0 %v638
      %766 = vmatpush.msra.mxu0 %v636
      %767 = vmatpush.msra.mxu0 %v634
      %768 = vmatpush.msra.mxu0 %v632
      %769 = vmatpush.msra.mxu0 %v630
      %770 = vmatpush.msra.mxu0 %v628
      %771 = vmatpush.msra.mxu0 %v626
      %772 = vmatpush.msra.mxu0 %v624
      %773 = vmatmul.f32.gmra.mxu0 %v621
      %v774 = vpop.f32.mrf.mxu0
      %v775 = vadd.f32 %v729, %v774
      %776 = vmatmul.f32.gmra.mxu0 %v622
      %v777 = vpop.f32.mrf.mxu0
      %v778 = vadd.f32 %v732, %v777
      %779 = vdwg.mxu0
      %780 = vst [vmem:[%s325] sm:$0xff] %v752
      %781 = vst [vmem:[%s325 + $0x8] sm:$0xff] %v775
      %782 = vst [vmem:[%s325 + $0x10] sm:$0xff] %v755
      %783 = vst [vmem:[%s325 + $0x18] sm:$0xff] %v778
      %p784 = scmp.lt.s32.totalorder %s19, 1
      %s785 = scalar_select %p784, %s19, 1
      %s786 = smul.addr %s785, 4
      %s787 = smul.addr %s786, 8
      %s788 = scalar_lea.vmem %s8, %s787
      // Predicated region
      $region53: #{shuffle_block_forward.1} parent=51 // pred_check
        %p789 = pneg %p215
      $region54: #{shuffle_block_forward.1} parent=51 // pred_check_branch
        %791 = sbr.rel (%p789) target = $region56
      $region55: #{shuffle_block_forward.1} parent=51 // pred_region
        _
      $region56: #{shuffle_block_forward.1} parent=51 // pred_fallthru
        _
    $region52: #{shuffle_block_forward.1} parent=5 // pred_fallthru
      _
    %p792 = scmp.le.s32.totalorder 2, %s14
    // Predicated region
    $region57: #{shuffle_block_forward.1} parent=5 // pred_check
      %p793 = pneg %p792
    $region58: #{shuffle_block_forward.1} parent=5 // pred_check_branch
      %795 = sbr.rel (%p793) target = $region60
    $region59: #{shuffle_block_forward.1} parent=5 // pred_region
      %s796 = ssub.s32 %s14, 2
      // Predicated region
      $region61: #{shuffle_block_forward.1} parent=59 // pred_check
        %p797 = pneg %p221
      $region62: #{shuffle_block_forward.1} parent=59 // pred_check_branch
        %799 = sbr.rel (%p797) target = $region64
      $region63: #{shuffle_block_forward.1} parent=59 // pred_region
        %p800 = scmp.lt.s32.totalorder %s20, 1
        %s801 = scalar_select %p800, %s20, 1
        %s802 = smul.addr %s801, 4
        %s803 = smul.addr %s802, 8
        %s804 = scalar_lea.vmem %s8, %s803
      $region64: #{shuffle_block_forward.1} parent=59 // pred_fallthru
        _
    $region60: #{shuffle_block_forward.1} parent=5 // pred_fallthru
      _
  $region6: #{shuffle_block_forward.1} parent=0 // loop_footer
    %s18 = sadd.s32 1, %s14
  $region7: #{shuffle_block_forward.1} parent=0 // loop_footer_branch
    %13 = sbr.rel target = $region3
  $region8: #{shuffle_block_forward.1} parent=0 // loop_exit
    _

</llo_original>
